<compile_context>
chip_gen: v6e
topology: v6e:2x2x1
jax: 0.10.0
libtpu: 0.0.40
codegen_flags: <defaults>
</compile_context>

<pallas_src>
import math

import jax
import jax.numpy as jnp
from jax.experimental import pallas as pl
from jax.experimental.pallas import tpu as pltpu

IN_FEATURES = 28 * 28          # 784  (multiple of 16 -> fine as bf16 K dim)
HIDDEN = 128                   # 100 -> zero-padded to 128
OUT_FEATURES = 10
OUT_PAD = 128                  # 10 -> zero-padded to 128 (lane-dense stores)

MAX_SINGLE_TILE = 256          # <= this: one grid step over the whole batch
TILE_CANDIDATES = (1024, 512, 256)   # preferred large-batch tiles (big first)


def _mlp_kernel(x_ref, w1_ref, b1_ref, w2_ref, b2_ref, w3_ref, b3_ref, o_ref):
    # x_ref: (T, 784) f32   w*_ref: (in, out) bf16   b*_ref: (1, out) f32
    x = x_ref[...].astype(jnp.bfloat16)                    # VPU cast, free
    h1 = jnp.dot(x, w1_ref[...], preferred_element_type=jnp.float32) + b1_ref[...]
    h1 = jnp.maximum(h1, 0.0).astype(jnp.bfloat16)         # ReLU (f32) -> bf16
    h2 = jnp.dot(h1, w2_ref[...], preferred_element_type=jnp.float32) + b2_ref[...]
    h2 = jnp.maximum(h2, 0.0).astype(jnp.bfloat16)         # ReLU (f32) -> bf16
    out = jnp.dot(h2, w3_ref[...], preferred_element_type=jnp.float32) + b3_ref[...]
    o_ref[...] = out.astype(o_ref.dtype)                   # bf16 writeback


def prepare_params(raw_params):
    """Zero-pad hidden/output dims to 128 and cast weights to bf16.

    Zero padding keeps results exact: padded hidden lanes are ReLU(0+0) = 0
    and the corresponding rows of the next layer's weight are zero.
    """
    w1, b1, w2, b2, w3, b3 = raw_params

    def pad_w(w, rows, cols):
        return jnp.pad(w, ((0, rows - w.shape[0]), (0, cols - w.shape[1]))
                       ).astype(jnp.bfloat16)

    def pad_b(b, cols):
        return jnp.pad(b, ((0, 0), (0, cols - b.shape[1]))).astype(jnp.float32)

    return (pad_w(w1, IN_FEATURES, HIDDEN), pad_b(b1, HIDDEN),
            pad_w(w2, HIDDEN, HIDDEN), pad_b(b2, HIDDEN),
            pad_w(w3, HIDDEN, OUT_PAD), pad_b(b3, OUT_PAD))


def _choose_tile(batch):
    """Static (trace-time) batch-tile selection.

    Small batches run as a single 16-row-aligned tile.  Larger batches use the
    biggest tile from TILE_CANDIDATES that (a) yields >= 2 grid steps (so the
    'parallel' axis shards across v7x's two TensorCores) and (b) wastes at
    most ~12.5% of rows on padding; otherwise the batch is balanced over
    ceil(batch/256) tiles with padding bounded to < 16 rows per step.
    """
    if batch <= MAX_SINGLE_TILE:
        tile = max(16, pl.cdiv(batch, 16) * 16)     # bf16 sublane packing: 16
        return tile, 1
    for cand in TILE_CANDIDATES:
        if cand < batch and pl.cdiv(batch, cand) * cand - batch <= batch // 8:
            return cand, pl.cdiv(batch, cand)
    n = pl.cdiv(batch, TILE_CANDIDATES[-1])
    tile = pl.cdiv(pl.cdiv(batch, n), 16) * 16
    return tile, pl.cdiv(batch, tile)


@jax.jit
def quantized_very_simple_net(img, prep_params):
    """Forward pass. img: (B, 1, 28, 28) f32 (NCHW). Returns (B, 10) f32."""
    w1, b1, w2, b2, w3, b3 = prep_params

    # QuantStub: identity (float eval mode).
    x = img.reshape(-1, IN_FEATURES)                 # == torch .view(-1, 784)
    batch = x.shape[0]

    tile, n_tiles = _choose_tile(batch)
    padded_batch = n_tiles * tile
    if padded_batch != batch:                        # only copy when ragged
        x = jnp.pad(x, ((0, padded_batch - batch), (0, 0)))

    flops = 2 * padded_batch * (IN_FEATURES * HIDDEN + HIDDEN * HIDDEN
                                + HIDDEN * OUT_PAD)
    bytes_accessed = (
        padded_batch * IN_FEATURES * 4                               # x (f32)
        + (IN_FEATURES * HIDDEN + HIDDEN * HIDDEN + HIDDEN * OUT_PAD) * 2
        + (HIDDEN + HIDDEN + OUT_PAD) * 4                            # biases
        + padded_batch * OUT_PAD * 2)                                # out bf16

    out = pl.pallas_call(
        _mlp_kernel,
        out_shape=jax.ShapeDtypeStruct((padded_batch, OUT_PAD), jnp.bfloat16),
        grid_spec=pltpu.PrefetchScalarGridSpec(
            num_scalar_prefetch=0,
            grid=(n_tiles,),
            in_specs=[
                # Activations: full 784-wide block of raw f32 rows.
                pl.BlockSpec((tile, IN_FEATURES), lambda i: (i, 0)),
                # Weights / biases: constant index_map -> VMEM-resident
                # across all grid steps (no re-DMA).
                pl.BlockSpec((IN_FEATURES, HIDDEN), lambda i: (0, 0)),
                pl.BlockSpec((1, HIDDEN), lambda i: (0, 0)),
                pl.BlockSpec((HIDDEN, HIDDEN), lambda i: (0, 0)),
                pl.BlockSpec((1, HIDDEN), lambda i: (0, 0)),
                pl.BlockSpec((HIDDEN, OUT_PAD), lambda i: (0, 0)),
                pl.BlockSpec((1, OUT_PAD), lambda i: (0, 0)),
            ],
            out_specs=pl.BlockSpec((tile, OUT_PAD), lambda i: (i, 0)),
        ),
        compiler_params=pltpu.CompilerParams(
            dimension_semantics=("parallel",)),
        cost_estimate=pl.CostEstimate(
            flops=flops, transcendentals=0, bytes_accessed=bytes_accessed),
    )(x, w1, b1, w2, b2, w3, b3)

    # DeQuantStub: identity (float eval mode). Drop padding; tiny f32 cast.
    return out[:batch, :OUT_FEATURES].astype(jnp.float32)


def init_params(key):
    """Deterministic init matching nn.Linear's default U(-1/sqrt(fan_in), .)."""
    def linear(key, fan_in, fan_out):
        kw, kb = jax.random.split(key)
        bound = 1.0 / math.sqrt(fan_in)
        # stored transposed: (in, out)
        w = jax.random.uniform(kw, (fan_in, fan_out), jnp.float32, -bound, bound)
        b = jax.random.uniform(kb, (1, fan_out), jnp.float32, -bound, bound)
        return w, b

    k1, k2, k3 = jax.random.split(key, 3)
    w1, b1 = linear(k1, IN_FEATURES, 100)
    w2, b2 = linear(k2, 100, 100)
    w3, b3 = linear(k3, 100, OUT_FEATURES)
    return (w1, b1, w2, b2, w3, b3)


def _reference(img, prep_params):
    """Pure-JAX reference using the same bf16 weights / f32 accumulation."""
    w1, b1, w2, b2, w3, b3 = prep_params
    x = img.reshape(-1, IN_FEATURES).astype(jnp.bfloat16)
    h1 = jnp.maximum(jnp.dot(x, w1, preferred_element_type=jnp.float32) + b1, 0.0)
    h1 = h1.astype(jnp.bfloat16)
    h2 = jnp.maximum(jnp.dot(h1, w2, preferred_element_type=jnp.float32) + b2, 0.0)
    h2 = h2.astype(jnp.bfloat16)
    out = jnp.dot(h2, w3, preferred_element_type=jnp.float32) + b3
    return out.astype(jnp.bfloat16)[:, :OUT_FEATURES].astype(jnp.float32)


# TODO(synk): true int8 QuantStub/DeQuantStub numerics (scale/zero-point) are
# not reproduced; this implements the float forward path (stubs are identity).

if __name__ == "__main__":
    key = jax.random.PRNGKey(0)
    k_img, k_params = jax.random.split(key)

    # Small MNIST-like batch: (B, C, H, W) = (2, 1, 28, 28), NCHW like PyTorch.
    img = jax.random.normal(k_img, (2, 1, 28, 28), jnp.float32)
    raw_params = init_params(k_params)
    params = prepare_params(raw_params)

    out = quantized_very_simple_net(img, params)
    out = jax.block_until_ready(out)

    ref = _reference(img, params)
    assert out.shape == (2, 10), out.shape
    assert jnp.allclose(out, ref, atol=2e-2, rtol=2e-2), "mismatch vs reference"

    print("KERNEL_OK")
</pallas_src>

<mosaic_0001>
module attributes {stable_mosaic.version = 11 : i64} {
  func.func @_mlp_kernel(%arg0: i32, %arg1: memref<16x784xf32, #tpu.memory_space<vmem>>, %arg2: memref<784x128xbf16, #tpu.memory_space<vmem>>, %arg3: memref<1x128xf32, #tpu.memory_space<vmem>>, %arg4: memref<128x128xbf16, #tpu.memory_space<vmem>>, %arg5: memref<1x128xf32, #tpu.memory_space<vmem>>, %arg6: memref<128x128xbf16, #tpu.memory_space<vmem>>, %arg7: memref<1x128xf32, #tpu.memory_space<vmem>>, %arg8: memref<16x128xbf16, #tpu.memory_space<vmem>>) attributes {dimension_semantics = [#tpu.dimension_semantics<parallel>], iteration_bounds = array<i64: 1>, scalar_prefetch = 0 : i64, scratch_operands = 0 : i64, tpu.core_type = #tpu.core_type<tc>, window_params = [{transform_indices = @transform_0, window_bounds = array<i64: 16, 784>}, {pipeline_mode = #tpu.pipeline_mode<synchronous>, transform_indices = @transform_1, window_bounds = array<i64: 784, 128>}, {pipeline_mode = #tpu.pipeline_mode<synchronous>, transform_indices = @transform_2, window_bounds = array<i64: 1, 128>}, {pipeline_mode = #tpu.pipeline_mode<synchronous>, transform_indices = @transform_3, window_bounds = array<i64: 128, 128>}, {pipeline_mode = #tpu.pipeline_mode<synchronous>, transform_indices = @transform_4, window_bounds = array<i64: 1, 128>}, {pipeline_mode = #tpu.pipeline_mode<synchronous>, transform_indices = @transform_5, window_bounds = array<i64: 128, 128>}, {pipeline_mode = #tpu.pipeline_mode<synchronous>, transform_indices = @transform_6, window_bounds = array<i64: 1, 128>}, {transform_indices = @transform_7, window_bounds = array<i64: 16, 128>}]} {
    %c0 = arith.constant 0 : index
    %c0_0 = arith.constant 0 : index
    %0 = vector.load %arg1[%c0, %c0_0] : memref<16x784xf32, #tpu.memory_space<vmem>>, vector<16x784xf32>
    %1 = arith.truncf %0 : vector<16x784xf32> to vector<16x784xbf16>
    %c0_1 = arith.constant 0 : index
    %c0_2 = arith.constant 0 : index
    %2 = vector.load %arg2[%c0_1, %c0_2] : memref<784x128xbf16, #tpu.memory_space<vmem>>, vector<784x128xbf16>
    %cst = arith.constant dense<0.000000e+00> : vector<16x128xf32>
    %3 = tpu.matmul %1, %2, %cst {dimension_numbers = #tpu.dot_dimension_numbers<[1], [0], [0], [1], [0, 0, 1, 1], [], []>} : vector<16x784xbf16>, vector<784x128xbf16>, vector<16x128xf32> -> vector<16x128xf32>
    %c0_3 = arith.constant 0 : index
    %c0_4 = arith.constant 0 : index
    %4 = vector.load %arg3[%c0_3, %c0_4] : memref<1x128xf32, #tpu.memory_space<vmem>>, vector<1x128xf32>
    %5 = vector.broadcast %4 : vector<1x128xf32> to vector<16x128xf32>
    %6 = arith.addf %3, %5 : vector<16x128xf32>
    %cst_5 = arith.constant 0.000000e+00 : f32
    %7 = vector.broadcast %cst_5 : f32 to vector<16x128xf32>
    %8 = arith.maximumf %6, %7 : vector<16x128xf32>
    %9 = arith.truncf %8 : vector<16x128xf32> to vector<16x128xbf16>
    %c0_6 = arith.constant 0 : index
    %c0_7 = arith.constant 0 : index
    %10 = vector.load %arg4[%c0_6, %c0_7] : memref<128x128xbf16, #tpu.memory_space<vmem>>, vector<128x128xbf16>
    %cst_8 = arith.constant dense<0.000000e+00> : vector<16x128xf32>
    %11 = tpu.matmul %9, %10, %cst_8 {dimension_numbers = #tpu.dot_dimension_numbers<[1], [0], [0], [1], [0, 0, 1, 1], [], []>} : vector<16x128xbf16>, vector<128x128xbf16>, vector<16x128xf32> -> vector<16x128xf32>
    %c0_9 = arith.constant 0 : index
    %c0_10 = arith.constant 0 : index
    %12 = vector.load %arg5[%c0_9, %c0_10] : memref<1x128xf32, #tpu.memory_space<vmem>>, vector<1x128xf32>
    %13 = vector.broadcast %12 : vector<1x128xf32> to vector<16x128xf32>
    %14 = arith.addf %11, %13 : vector<16x128xf32>
    %cst_11 = arith.constant 0.000000e+00 : f32
    %15 = vector.broadcast %cst_11 : f32 to vector<16x128xf32>
    %16 = arith.maximumf %14, %15 : vector<16x128xf32>
    %17 = arith.truncf %16 : vector<16x128xf32> to vector<16x128xbf16>
    %c0_12 = arith.constant 0 : index
    %c0_13 = arith.constant 0 : index
    %18 = vector.load %arg6[%c0_12, %c0_13] : memref<128x128xbf16, #tpu.memory_space<vmem>>, vector<128x128xbf16>
    %cst_14 = arith.constant dense<0.000000e+00> : vector<16x128xf32>
    %19 = tpu.matmul %17, %18, %cst_14 {dimension_numbers = #tpu.dot_dimension_numbers<[1], [0], [0], [1], [0, 0, 1, 1], [], []>} : vector<16x128xbf16>, vector<128x128xbf16>, vector<16x128xf32> -> vector<16x128xf32>
    %c0_15 = arith.constant 0 : index
    %c0_16 = arith.constant 0 : index
    %20 = vector.load %arg7[%c0_15, %c0_16] : memref<1x128xf32, #tpu.memory_space<vmem>>, vector<1x128xf32>
    %21 = vector.broadcast %20 : vector<1x128xf32> to vector<16x128xf32>
    %22 = arith.addf %19, %21 : vector<16x128xf32>
    %23 = arith.truncf %22 : vector<16x128xf32> to vector<16x128xbf16>
    %c0_17 = arith.constant 0 : index
    %c0_18 = arith.constant 0 : index
    %24 = vector.load %arg8[%c0_17, %c0_18] : memref<16x128xbf16, #tpu.memory_space<vmem>>, vector<16x128xbf16>
    tpu.vector_store %arg8[%c0_17, %c0_18], %23 {strides = array<i32>} : memref<16x128xbf16, #tpu.memory_space<vmem>>, vector<16x128xbf16>,
    return
  }
  func.func @transform_0(%arg0: i32) -> (i32, i32) {
    %c0_i32 = arith.constant 0 : i32
    %c0_i32_0 = arith.constant 0 : i32
    return %arg0, %c0_i32 : i32, i32
  }
  func.func @transform_1(%arg0: i32) -> (i32, i32) {
    %c0_i32 = arith.constant 0 : i32
    %c0_i32_0 = arith.constant 0 : i32
    %c0_i32_1 = arith.constant 0 : i32
    return %c0_i32, %c0_i32_0 : i32, i32
  }
  func.func @transform_2(%arg0: i32) -> (i32, i32) {
    %c0_i32 = arith.constant 0 : i32
    %c0_i32_0 = arith.constant 0 : i32
    %c0_i32_1 = arith.constant 0 : i32
    return %c0_i32, %c0_i32_0 : i32, i32
  }
  func.func @transform_3(%arg0: i32) -> (i32, i32) {
    %c0_i32 = arith.constant 0 : i32
    %c0_i32_0 = arith.constant 0 : i32
    %c0_i32_1 = arith.constant 0 : i32
    return %c0_i32, %c0_i32_0 : i32, i32
  }
  func.func @transform_4(%arg0: i32) -> (i32, i32) {
    %c0_i32 = arith.constant 0 : i32
    %c0_i32_0 = arith.constant 0 : i32
    %c0_i32_1 = arith.constant 0 : i32
    return %c0_i32, %c0_i32_0 : i32, i32
  }
  func.func @transform_5(%arg0: i32) -> (i32, i32) {
    %c0_i32 = arith.constant 0 : i32
    %c0_i32_0 = arith.constant 0 : i32
    %c0_i32_1 = arith.constant 0 : i32
    return %c0_i32, %c0_i32_0 : i32, i32
  }
  func.func @transform_6(%arg0: i32) -> (i32, i32) {
    %c0_i32 = arith.constant 0 : i32
    %c0_i32_0 = arith.constant 0 : i32
    %c0_i32_1 = arith.constant 0 : i32
    return %c0_i32, %c0_i32_0 : i32, i32
  }
  func.func @transform_7(%arg0: i32) -> (i32, i32) {
    %c0_i32 = arith.constant 0 : i32
    %c0_i32_0 = arith.constant 0 : i32
    return %arg0, %c0_i32 : i32, i32
  }
}

</mosaic_0001>

<llo_original>
// kernel: quantized_very_simple_net.1
$region0: #{quantized_very_simple_net.1}
  #allocation0 [shape = 'u32[]', space=smem, size = 0x4, offset = 0x4, fixed_abs, tag = 'smem constant byte address 0x4 - core index']
  #allocation1 [shape = 'u32[144,128]{1,0:T(1,128)}', space=vmem, size = 0x12000, scoped, tag = 'internal scratch']
  %s0 = inlined_call_operand.vmem [shape: f32[16,784], index: 0, kind: input, shape index: {}]
  %s1 = inlined_call_operand.hbm [shape: bf16[784,128], index: 1, kind: input, shape index: {}]
  %s2 = inlined_call_operand.vmem [shape: f32[1,128], index: 2, kind: input, shape index: {}]
  %s3 = inlined_call_operand.vmem [shape: bf16[128,128], index: 3, kind: input, shape index: {}]
  %s4 = inlined_call_operand.vmem [shape: f32[1,128], index: 4, kind: input, shape index: {}]
  %s5 = inlined_call_operand.vmem [shape: bf16[128,128], index: 5, kind: input, shape index: {}]
  %s6 = inlined_call_operand.vmem [shape: f32[1,128], index: 6, kind: input, shape index: {}]
  %s7 = inlined_call_operand.vmem [shape: bf16[16,128], index: 7, kind: output, shape index: {}]
  %s8 = sld [smem:[#allocation0]]
  $region42: #{quantized_very_simple_net.1} parent=0
    _
  %s10 = ssub.s32 1, %s8
  %s11 = scalar_select 0, %s10, %s8
  $region1: #{quantized_very_simple_net.1} parent=0
    #allocation2 [shape = 'u8[200704]{0}', space=vmem, size = 0x31000, scoped, tag = 'input window, operand 1, single buffered']
    #allocation3 [shape = 's32[1]{0}', space=sflag, size = 0x4, scoped, tag = 'scoped memory for quantized_very_simple_net.1']
    %12 = vsyncpa [#allocation3], 0
    // Predicated region
    $region2: #{quantized_very_simple_net.1} parent=1 // pred_check
      _
    $region3: #{quantized_very_simple_net.1} parent=1 // pred_check_branch
      %14 = sbr.rel (0) target = $region5
    $region4: #{quantized_very_simple_net.1} parent=1 // pred_region
      _
    $region5: #{quantized_very_simple_net.1} parent=1 // pred_fallthru
      _
    // Predicated region
    $region6: #{quantized_very_simple_net.1} parent=1 // pred_check
      _
    $region7: #{quantized_very_simple_net.1} parent=1 // pred_check_branch
      %16 = sbr.rel (0) target = $region9
    $region8: #{quantized_very_simple_net.1} parent=1 // pred_region
      %s18 = ssub.s32 6272, 6272
      %19 = vsyncadd [#allocation3], %s18
      %s20 = sshll.u32 [#allocation2], 4
      %s21 = int_to_ptr.vmem [resolvable:$true] %s20
      %26 = dma.hbm_to_vmem [thread:$0]  %s1, 6272, %s21, [#allocation3], 64, 64, 4
    $region9: #{quantized_very_simple_net.1} parent=1 // pred_fallthru
      _
    // Predicated region
    $region10: #{quantized_very_simple_net.1} parent=1 // pred_check
      _
    $region11: #{quantized_very_simple_net.1} parent=1 // pred_check_branch
      %28 = sbr.rel (0) target = $region13
    $region12: #{quantized_very_simple_net.1} parent=1 // pred_region
      _
    $region13: #{quantized_very_simple_net.1} parent=1 // pred_fallthru
      _
    // Predicated region
    $region14: #{quantized_very_simple_net.1} parent=1 // pred_check
      _
    $region15: #{quantized_very_simple_net.1} parent=1 // pred_check_branch
      %30 = sbr.rel (0) target = $region17
    $region16: #{quantized_very_simple_net.1} parent=1 // pred_region
      _
    $region17: #{quantized_very_simple_net.1} parent=1 // pred_fallthru
      _
    // Predicated region
    $region18: #{quantized_very_simple_net.1} parent=1 // pred_check
      _
    $region19: #{quantized_very_simple_net.1} parent=1 // pred_check_branch
      %32 = sbr.rel (0) target = $region21
    $region20: #{quantized_very_simple_net.1} parent=1 // pred_region
      _
    $region21: #{quantized_very_simple_net.1} parent=1 // pred_fallthru
      _
    // Predicated region
    $region22: #{quantized_very_simple_net.1} parent=1 // pred_check
      _
    $region23: #{quantized_very_simple_net.1} parent=1 // pred_check_branch
      %34 = sbr.rel (0) target = $region25
    $region24: #{quantized_very_simple_net.1} parent=1 // pred_region
      _
    $region25: #{quantized_very_simple_net.1} parent=1 // pred_fallthru
      _
    // Predicated region
    $region26: #{quantized_very_simple_net.1} parent=1 // pred_check
      _
    $region27: #{quantized_very_simple_net.1} parent=1 // pred_check_branch
      %36 = sbr.rel (0) target = $region29
    $region28: #{quantized_very_simple_net.1} parent=1 // pred_region
      _
    $region29: #{quantized_very_simple_net.1} parent=1 // pred_fallthru
      _
    // Predicated region
    $region30: #{quantized_very_simple_net.1} parent=1 // pred_check
      _
    $region31: #{quantized_very_simple_net.1} parent=1 // pred_check_branch
      %38 = sbr.rel (0) target = $region33
    $region32: #{quantized_very_simple_net.1} parent=1 // pred_region
      %39 = dma.done [#allocation3], 6272
    $region33: #{quantized_very_simple_net.1} parent=1 // pred_fallthru
      _
    %v41 = vld [vmem:[%s0] sm:$0xff]
    %v42 = vld [vmem:[%s0 + $0x8] sm:$0xff]
    %v43 = vld [vmem:[%s0 + $0x10] sm:$0xff]
    %v44 = vld [vmem:[%s0 + $0x18] sm:$0xff]
    %v45 = vld [vmem:[%s0 + $0x20] sm:$0xff]
    %v46 = vld [vmem:[%s0 + $0x28] sm:$0xff]
    %v47 = vld [vmem:[%s0 + $0x30] sm:$0xff]
    %v48 = vld [vmem:[%s0 + $0x38] sm:$0xff]
    %v49 = vld [vmem:[%s0 + $0x40] sm:$0xff]
    %v50 = vld [vmem:[%s0 + $0x48] sm:$0xff]
    %v51 = vld [vmem:[%s0 + $0x50] sm:$0xff]
    %v52 = vld [vmem:[%s0 + $0x58] sm:$0xff]
    %v53 = vld [vmem:[%s0 + $0x60] sm:$0xff]
    %v54 = vld [vmem:[%s0 + $0x68] sm:$0xff]
    %v55 = vpack.c.bf16 %v48, %v41
    %v56 = vpack.c.bf16 %v49, %v42
    %v57 = vpack.c.bf16 %v50, %v43
    %v58 = vpack.c.bf16 %v51, %v44
    %v59 = vpack.c.bf16 %v52, %v45
    %v60 = vpack.c.bf16 %v53, %v46
    %v61 = vpack.c.bf16 %v54, %v47
    %v62 = vld [vmem:[#allocation2] sm:$0xf]
    %v63 = vld [vmem:[#allocation2 + $0x4] sm:$0xf]
    %v64 = vld [vmem:[#allocation2 + $0x8] sm:$0xf]
    %v65 = vld [vmem:[#allocation2 + $0xc] sm:$0xf]
    %v66 = vld [vmem:[#allocation2 + $0x10] sm:$0xf]
    %v67 = vld [vmem:[#allocation2 + $0x14] sm:$0xf]
    %v68 = vld [vmem:[#allocation2 + $0x18] sm:$0xf]
    %v69 = vld [vmem:[#allocation2 + $0x1c] sm:$0xf]
    %v70 = vld [vmem:[#allocation2 + $0x20] sm:$0xf]
    %v71 = vld [vmem:[#allocation2 + $0x24] sm:$0xf]
    %v72 = vld [vmem:[#allocation2 + $0x28] sm:$0xf]
    %v73 = vld [vmem:[#allocation2 + $0x2c] sm:$0xf]
    %v74 = vld [vmem:[#allocation2 + $0x30] sm:$0xf]
    %v75 = vld [vmem:[#allocation2 + $0x34] sm:$0xf]
    %v76 = vld [vmem:[#allocation2 + $0x38] sm:$0xf]
    %v77 = vld [vmem:[#allocation2 + $0x3c] sm:$0xf]
    %v78 = vld [vmem:[#allocation2 + $0x40] sm:$0xf]
    %v79 = vld [vmem:[#allocation2 + $0x44] sm:$0xf]
    %v80 = vld [vmem:[#allocation2 + $0x48] sm:$0xf]
    %v81 = vld [vmem:[#allocation2 + $0x4c] sm:$0xf]
    %v82 = vld [vmem:[#allocation2 + $0x50] sm:$0xf]
    %v83 = vld [vmem:[#allocation2 + $0x54] sm:$0xf]
    %v84 = vld [vmem:[#allocation2 + $0x58] sm:$0xf]
    %v85 = vld [vmem:[#allocation2 + $0x5c] sm:$0xf]
    %v86 = vld [vmem:[#allocation2 + $0x60] sm:$0xf]
    %v87 = vld [vmem:[#allocation2 + $0x64] sm:$0xf]
    %v88 = vld [vmem:[#allocation2 + $0x68] sm:$0xf]
    %v89 = vld [vmem:[#allocation2 + $0x6c] sm:$0xf]
    %v90 = vld [vmem:[#allocation2 + $0x70] sm:$0xf]
    %v91 = vld [vmem:[#allocation2 + $0x74] sm:$0xf]
    %v92 = vld [vmem:[#allocation2 + $0x78] sm:$0xf]
    %v93 = vld [vmem:[#allocation2 + $0x7c] sm:$0xf]
    %v94 = vld [vmem:[#allocation2 + $0x80] sm:$0xf]
    %v95 = vld [vmem:[#allocation2 + $0x84] sm:$0xf]
    %v96 = vld [vmem:[#allocation2 + $0x88] sm:$0xf]
    %v97 = vld [vmem:[#allocation2 + $0x8c] sm:$0xf]
    %v98 = vld [vmem:[#allocation2 + $0x90] sm:$0xf]
    %v99 = vld [vmem:[#allocation2 + $0x94] sm:$0xf]
    %v100 = vld [vmem:[#allocation2 + $0x98] sm:$0xf]
    %v101 = vld [vmem:[#allocation2 + $0x9c] sm:$0xf]
    %v102 = vld [vmem:[#allocation2 + $0xa0] sm:$0xf]
    %v103 = vld [vmem:[#allocation2 + $0xa4] sm:$0xf]
    %v104 = vld [vmem:[#allocation2 + $0xa8] sm:$0xf]
    %v105 = vld [vmem:[#allocation2 + $0xac] sm:$0xf]
    %v106 = vld [vmem:[#allocation2 + $0xb0] sm:$0xf]
    %v107 = vld [vmem:[#allocation2 + $0xb4] sm:$0xf]
    %v108 = vld [vmem:[#allocation2 + $0xb8] sm:$0xf]
    %v109 = vld [vmem:[#allocation2 + $0xbc] sm:$0xf]
    %v110 = vld [vmem:[#allocation2 + $0xc0] sm:$0xf]
    %v111 = vld [vmem:[#allocation2 + $0xc4] sm:$0xf]
    %v112 = vld [vmem:[#allocation2 + $0xc8] sm:$0xf]
    %v113 = vld [vmem:[#allocation2 + $0xcc] sm:$0xf]
    %v114 = vld [vmem:[#allocation2 + $0xd0] sm:$0xf]
    %v115 = vld [vmem:[#allocation2 + $0xd4] sm:$0xf]
    %v116 = vld [vmem:[#allocation2 + $0xd8] sm:$0xf]
    %v117 = vld [vmem:[#allocation2 + $0xdc] sm:$0xf]
    %v118 = vld [vmem:[#allocation2 + $0xe0] sm:$0xf]
    %v119 = vld [vmem:[#allocation2 + $0xe4] sm:$0xf]
    %v120 = vld [vmem:[#allocation2 + $0xe8] sm:$0xf]
    %v121 = vld [vmem:[#allocation2 + $0xec] sm:$0xf]
    %v122 = vld [vmem:[#allocation2 + $0xf0] sm:$0xf]
    %v123 = vld [vmem:[#allocation2 + $0xf4] sm:$0xf]
    %v124 = vld [vmem:[#allocation2 + $0xf8] sm:$0xf]
    %v125 = vld [vmem:[#allocation2 + $0xfc] sm:$0xf]
    %v126 = vld [vmem:[#allocation2 + $0x100] sm:$0xf]
    %v127 = vld [vmem:[#allocation2 + $0x104] sm:$0xf]
    %v128 = vld [vmem:[#allocation2 + $0x108] sm:$0xf]
    %v129 = vld [vmem:[#allocation2 + $0x10c] sm:$0xf]
    %v130 = vld [vmem:[#allocation2 + $0x110] sm:$0xf]
    %v131 = vld [vmem:[#allocation2 + $0x114] sm:$0xf]
    %v132 = vld [vmem:[#allocation2 + $0x118] sm:$0xf]
    %v133 = vld [vmem:[#allocation2 + $0x11c] sm:$0xf]
    %v134 = vld [vmem:[#allocation2 + $0x120] sm:$0xf]
    %v135 = vld [vmem:[#allocation2 + $0x124] sm:$0xf]
    %v136 = vld [vmem:[#allocation2 + $0x128] sm:$0xf]
    %v137 = vld [vmem:[#allocation2 + $0x12c] sm:$0xf]
    %v138 = vld [vmem:[#allocation2 + $0x130] sm:$0xf]
    %v139 = vld [vmem:[#allocation2 + $0x134] sm:$0xf]
    %v140 = vld [vmem:[#allocation2 + $0x138] sm:$0xf]
    %v141 = vld [vmem:[#allocation2 + $0x13c] sm:$0xf]
    %v142 = vld [vmem:[#allocation2 + $0x140] sm:$0xf]
    %v143 = vld [vmem:[#allocation2 + $0x144] sm:$0xf]
    %v144 = vld [vmem:[#allocation2 + $0x148] sm:$0xf]
    %v145 = vld [vmem:[#allocation2 + $0x14c] sm:$0xf]
    %v146 = vld [vmem:[#allocation2 + $0x150] sm:$0xf]
    %v147 = vld [vmem:[#allocation2 + $0x154] sm:$0xf]
    %v148 = vld [vmem:[#allocation2 + $0x158] sm:$0xf]
    %v149 = vld [vmem:[#allocation2 + $0x15c] sm:$0xf]
    %v150 = vld [vmem:[#allocation2 + $0x160] sm:$0xf]
    %v151 = vld [vmem:[#allocation2 + $0x164] sm:$0xf]
    %v152 = vld [vmem:[#allocation2 + $0x168] sm:$0xf]
    %v153 = vld [vmem:[#allocation2 + $0x16c] sm:$0xf]
    %v154 = vld [vmem:[#allocation2 + $0x170] sm:$0xf]
    %v155 = vld [vmem:[#allocation2 + $0x174] sm:$0xf]
    %v156 = vld [vmem:[#allocation2 + $0x178] sm:$0xf]
    %v157 = vld [vmem:[#allocation2 + $0x17c] sm:$0xf]
    %v158 = vld [vmem:[#allocation2 + $0x180] sm:$0xf]
    %v159 = vld [vmem:[#allocation2 + $0x184] sm:$0xf]
    %v160 = vld [vmem:[%s2] sm:$0x1]
    %v162 = vlaneseq
    %v163 = vshrl.u32 %v162, 7
    %v164 = vsub.s32 0, %v163
    %v165 = vrot.slane %v160, %v164
    %v265 = vunpack.c.l.b16 %v62
    %v266 = vunpack.c.l.b16 %v63
    %v267 = vunpack.c.l.b16 %v64
    %v268 = vunpack.c.l.b16 %v65
    %v269 = vunpack.c.l.b16 %v66
    %v270 = vunpack.c.l.b16 %v67
    %v271 = vunpack.c.l.b16 %v68
    %v272 = vunpack.c.l.b16 %v69
    %v273 = vunpack.c.l.b16 %v70
    %v274 = vunpack.c.l.b16 %v71
    %v275 = vunpack.c.l.b16 %v72
    %v276 = vunpack.c.l.b16 %v73
    %v277 = vunpack.c.l.b16 %v74
    %v278 = vunpack.c.l.b16 %v75
    %v279 = vunpack.c.l.b16 %v76
    %v280 = vunpack.c.l.b16 %v77
    %v281 = vunpack.c.l.b16 %v78
    %v282 = vunpack.c.l.b16 %v79
    %v283 = vunpack.c.l.b16 %v80
    %v284 = vunpack.c.l.b16 %v81
    %v285 = vunpack.c.l.b16 %v82
    %v286 = vunpack.c.l.b16 %v83
    %v287 = vunpack.c.l.b16 %v84
    %v288 = vunpack.c.l.b16 %v85
    %v289 = vunpack.c.l.b16 %v86
    %v290 = vunpack.c.l.b16 %v87
    %v291 = vunpack.c.l.b16 %v88
    %v292 = vunpack.c.l.b16 %v89
    %v293 = vunpack.c.l.b16 %v90
    %v294 = vunpack.c.l.b16 %v91
    %v295 = vunpack.c.l.b16 %v92
    %v296 = vunpack.c.l.b16 %v93
    %v297 = vunpack.c.l.b16 %v94
    %v298 = vunpack.c.l.b16 %v95
    %v299 = vunpack.c.l.b16 %v96
    %v300 = vunpack.c.l.b16 %v97
    %v301 = vunpack.c.l.b16 %v98
    %v302 = vunpack.c.l.b16 %v99
    %v303 = vunpack.c.l.b16 %v100
    %v304 = vunpack.c.l.b16 %v101
    %v305 = vunpack.c.l.b16 %v102
    %v306 = vunpack.c.l.b16 %v103
    %v307 = vunpack.c.l.b16 %v104
    %v308 = vunpack.c.l.b16 %v105
    %v309 = vunpack.c.l.b16 %v106
    %v310 = vunpack.c.l.b16 %v107
    %v311 = vunpack.c.l.b16 %v108
    %v312 = vunpack.c.l.b16 %v109
    %v313 = vunpack.c.l.b16 %v110
    %v314 = vunpack.c.l.b16 %v111
    %v315 = vunpack.c.l.b16 %v112
    %v316 = vunpack.c.l.b16 %v113
    %v317 = vunpack.c.l.b16 %v114
    %v318 = vunpack.c.l.b16 %v115
    %v319 = vunpack.c.l.b16 %v116
    %v320 = vunpack.c.l.b16 %v117
    %v321 = vunpack.c.l.b16 %v118
    %v322 = vunpack.c.l.b16 %v119
    %v323 = vunpack.c.l.b16 %v120
    %v324 = vunpack.c.l.b16 %v121
    %v325 = vunpack.c.l.b16 %v122
    %v326 = vunpack.c.l.b16 %v123
    %v327 = vunpack.c.l.b16 %v124
    %v328 = vunpack.c.l.b16 %v125
    %v329 = vunpack.c.l.b16 %v126
    %v330 = vunpack.c.l.b16 %v127
    %v331 = vunpack.c.l.b16 %v128
    %v332 = vunpack.c.l.b16 %v129
    %v333 = vunpack.c.l.b16 %v130
    %v334 = vunpack.c.l.b16 %v131
    %v335 = vunpack.c.l.b16 %v132
    %v336 = vunpack.c.l.b16 %v133
    %v337 = vunpack.c.l.b16 %v134
    %v338 = vunpack.c.l.b16 %v135
    %v339 = vunpack.c.l.b16 %v136
    %v340 = vunpack.c.l.b16 %v137
    %v341 = vunpack.c.l.b16 %v138
    %v342 = vunpack.c.l.b16 %v139
    %v343 = vunpack.c.l.b16 %v140
    %v344 = vunpack.c.l.b16 %v141
    %v345 = vunpack.c.l.b16 %v142
    %v346 = vunpack.c.l.b16 %v143
    %v347 = vunpack.c.l.b16 %v144
    %v348 = vunpack.c.l.b16 %v145
    %v349 = vunpack.c.l.b16 %v146
    %v350 = vunpack.c.l.b16 %v147
    %v351 = vunpack.c.l.b16 %v148
    %v352 = vunpack.c.l.b16 %v149
    %v353 = vunpack.c.l.b16 %v150
    %v354 = vunpack.c.l.b16 %v151
    %v355 = vunpack.c.l.b16 %v152
    %v356 = vunpack.c.l.b16 %v153
    %v357 = vunpack.c.l.b16 %v154
    %v358 = vunpack.c.l.b16 %v155
    %v359 = vunpack.c.l.b16 %v156
    %v360 = vunpack.c.l.b16 %v157
    %v361 = vunpack.c.l.b16 %v158
    %v362 = vunpack.c.l.b16 %v159
    %v363 = vpack.c.b16 %v266, %v265
    %v364 = vpack.c.b16 %v268, %v267
    %v365 = vpack.c.b16 %v270, %v269
    %v366 = vpack.c.b16 %v272, %v271
    %v367 = vpack.c.b16 %v274, %v273
    %v368 = vpack.c.b16 %v276, %v275
    %v369 = vpack.c.b16 %v278, %v277
    %v370 = vpack.c.b16 %v280, %v279
    %v371 = vpack.c.b16 %v282, %v281
    %v372 = vpack.c.b16 %v284, %v283
    %v373 = vpack.c.b16 %v286, %v285
    %v374 = vpack.c.b16 %v288, %v287
    %v375 = vpack.c.b16 %v290, %v289
    %v376 = vpack.c.b16 %v292, %v291
    %v377 = vpack.c.b16 %v294, %v293
    %v378 = vpack.c.b16 %v296, %v295
    %v379 = vpack.c.b16 %v298, %v297
    %v380 = vpack.c.b16 %v300, %v299
    %v381 = vpack.c.b16 %v302, %v301
    %v382 = vpack.c.b16 %v304, %v303
    %v383 = vpack.c.b16 %v306, %v305
    %v384 = vpack.c.b16 %v308, %v307
    %v385 = vpack.c.b16 %v310, %v309
    %v386 = vpack.c.b16 %v312, %v311
    %v387 = vpack.c.b16 %v314, %v313
    %v388 = vpack.c.b16 %v316, %v315
    %v389 = vpack.c.b16 %v318, %v317
    %v390 = vpack.c.b16 %v320, %v319
    %v391 = vpack.c.b16 %v322, %v321
    %v392 = vpack.c.b16 %v324, %v323
    %v393 = vpack.c.b16 %v326, %v325
    %v394 = vpack.c.b16 %v328, %v327
    %v395 = vpack.c.b16 %v330, %v329
    %v396 = vpack.c.b16 %v332, %v331
    %v397 = vpack.c.b16 %v334, %v333
    %v398 = vpack.c.b16 %v336, %v335
    %v399 = vpack.c.b16 %v338, %v337
    %v400 = vpack.c.b16 %v340, %v339
    %v401 = vpack.c.b16 %v342, %v341
    %v402 = vpack.c.b16 %v344, %v343
    %v403 = vpack.c.b16 %v346, %v345
    %v404 = vpack.c.b16 %v348, %v347
    %v405 = vpack.c.b16 %v350, %v349
    %v406 = vpack.c.b16 %v352, %v351
    %v407 = vpack.c.b16 %v354, %v353
    %v408 = vpack.c.b16 %v356, %v355
    %v409 = vpack.c.b16 %v358, %v357
    %v410 = vpack.c.b16 %v360, %v359
    %v411 = vpack.c.b16 %v362, %v361
    %vm461 = vcmask 130048
    %v463 = vsel %vm461, %v61, 0
    %465 = vmatprep.subr.bf16.mxu0 0
    %466 = vmatpush1.bf16.msra.mxu0 %v370
    %467 = vmatprep.subr.bf16.mxu0 0
    %468 = vmatpush1.bf16.msra.mxu0 %v369
    %469 = vmatprep.subr.bf16.mxu0 0
    %470 = vmatpush1.bf16.msra.mxu0 %v368
    %471 = vmatprep.subr.bf16.mxu0 0
    %472 = vmatpush1.bf16.msra.mxu0 %v367
    %473 = vmatprep.subr.bf16.mxu0 0
    %474 = vmatpush1.bf16.msra.mxu0 %v366
    %475 = vmatprep.subr.bf16.mxu0 0
    %476 = vmatpush1.bf16.msra.mxu0 %v365
    %477 = vmatprep.subr.bf16.mxu0 0
    %478 = vmatpush1.bf16.msra.mxu0 %v364
    %479 = vmatprep.subr.bf16.mxu0 0
    %480 = vmatpush1.bf16.msra.mxu0 %v363
    %481 = vmatprep.subr.bf16.mxu0 0
    %482 = vmatpush2.bf16.msra.mxu0 %v378
    %483 = vmatprep.subr.bf16.mxu0 0
    %484 = vmatpush2.bf16.msra.mxu0 %v377
    %485 = vmatprep.subr.bf16.mxu0 0
    %486 = vmatpush2.bf16.msra.mxu0 %v376
    %487 = vmatprep.subr.bf16.mxu0 0
    %488 = vmatpush2.bf16.msra.mxu0 %v375
    %489 = vmatprep.subr.bf16.mxu0 0
    %490 = vmatpush2.bf16.msra.mxu0 %v374
    %491 = vmatprep.subr.bf16.mxu0 0
    %492 = vmatpush2.bf16.msra.mxu0 %v373
    %493 = vmatprep.subr.bf16.mxu0 0
    %494 = vmatpush2.bf16.msra.mxu0 %v372
    %495 = vmatprep.subr.bf16.mxu0 0
    %496 = vmatpush2.bf16.msra.mxu0 %v371
    %497 = vmatprep.mubr.bf16.mxu0 %v56
    %498 = vmatmul.mubr.bf16.gmra.mxu0 %v55
    %v499 = vpop.f32.mrf.mxu0
    %v500 = vadd.f32 %v165, %v499
    %v501 = vpop.f32.mrf.mxu0
    %v502 = vpop.f32.mrf.mxu0
    %v503 = vadd.f32 %v165, %v502
    %v504 = vpop.f32.mrf.mxu0
    %505 = vdwg.mxu0
    %506 = vmatprep.subr.bf16.mxu0 0
    %507 = vmatpush1.bf16.msra.mxu0 %v386
    %508 = vmatprep.subr.bf16.mxu0 0
    %509 = vmatpush1.bf16.msra.mxu0 %v385
    %510 = vmatprep.subr.bf16.mxu0 0
    %511 = vmatpush1.bf16.msra.mxu0 %v384
    %512 = vmatprep.subr.bf16.mxu0 0
    %513 = vmatpush1.bf16.msra.mxu0 %v383
    %514 = vmatprep.subr.bf16.mxu0 0
    %515 = vmatpush1.bf16.msra.mxu0 %v382
    %516 = vmatprep.subr.bf16.mxu0 0
    %517 = vmatpush1.bf16.msra.mxu0 %v381
    %518 = vmatprep.subr.bf16.mxu0 0
    %519 = vmatpush1.bf16.msra.mxu0 %v380
    %520 = vmatprep.subr.bf16.mxu0 0
    %521 = vmatpush1.bf16.msra.mxu0 %v379
    %522 = vmatprep.subr.bf16.mxu0 0
    %523 = vmatpush2.bf16.msra.mxu0 %v394
    %524 = vmatprep.subr.bf16.mxu0 0
    %525 = vmatpush2.bf16.msra.mxu0 %v393
    %526 = vmatprep.subr.bf16.mxu0 0
    %527 = vmatpush2.bf16.msra.mxu0 %v392
    %528 = vmatprep.subr.bf16.mxu0 0
    %529 = vmatpush2.bf16.msra.mxu0 %v391
    %530 = vmatprep.subr.bf16.mxu0 0
    %531 = vmatpush2.bf16.msra.mxu0 %v390
    %532 = vmatprep.subr.bf16.mxu0 0
    %533 = vmatpush2.bf16.msra.mxu0 %v389
    %534 = vmatprep.subr.bf16.mxu0 0
    %535 = vmatpush2.bf16.msra.mxu0 %v388
    %536 = vmatprep.subr.bf16.mxu0 0
    %537 = vmatpush2.bf16.msra.mxu0 %v387
    %538 = vmatprep.mubr.bf16.mxu0 %v58
    %539 = vmatmul.mubr.bf16.gmra.mxu0 %v57
    %v540 = vpop.f32.mrf.mxu0
    %v541 = vadd.f32 %v500, %v540
    %v542 = vpop.f32.mrf.mxu0
    %v543 = vpop.f32.mrf.mxu0
    %v544 = vadd.f32 %v503, %v543
    %v545 = vpop.f32.mrf.mxu0
    %546 = vdwg.mxu0
    %547 = vmatprep.subr.bf16.mxu0 0
    %548 = vmatpush1.bf16.msra.mxu0 %v402
    %549 = vmatprep.subr.bf16.mxu0 0
    %550 = vmatpush1.bf16.msra.mxu0 %v401
    %551 = vmatprep.subr.bf16.mxu0 0
    %552 = vmatpush1.bf16.msra.mxu0 %v400
    %553 = vmatprep.subr.bf16.mxu0 0
    %554 = vmatpush1.bf16.msra.mxu0 %v399
    %555 = vmatprep.subr.bf16.mxu0 0
    %556 = vmatpush1.bf16.msra.mxu0 %v398
    %557 = vmatprep.subr.bf16.mxu0 0
    %558 = vmatpush1.bf16.msra.mxu0 %v397
    %559 = vmatprep.subr.bf16.mxu0 0
    %560 = vmatpush1.bf16.msra.mxu0 %v396
    %561 = vmatprep.subr.bf16.mxu0 0
    %562 = vmatpush1.bf16.msra.mxu0 %v395
    %563 = vmatprep.subr.bf16.mxu0 0
    %564 = vmatpush2.bf16.msra.mxu0 %v410
    %565 = vmatprep.subr.bf16.mxu0 0
    %566 = vmatpush2.bf16.msra.mxu0 %v409
    %567 = vmatprep.subr.bf16.mxu0 0
    %568 = vmatpush2.bf16.msra.mxu0 %v408
    %569 = vmatprep.subr.bf16.mxu0 0
    %570 = vmatpush2.bf16.msra.mxu0 %v407
    %571 = vmatprep.subr.bf16.mxu0 0
    %572 = vmatpush2.bf16.msra.mxu0 %v406
    %573 = vmatprep.subr.bf16.mxu0 0
    %574 = vmatpush2.bf16.msra.mxu0 %v405
    %575 = vmatprep.subr.bf16.mxu0 0
    %576 = vmatpush2.bf16.msra.mxu0 %v404
    %577 = vmatprep.subr.bf16.mxu0 0
    %578 = vmatpush2.bf16.msra.mxu0 %v403
    %579 = vmatprep.mubr.bf16.mxu0 %v60
    %580 = vmatmul.mubr.bf16.gmra.mxu0 %v59
    %v581 = vpop.f32.mrf.mxu0
    %v582 = vadd.f32 %v541, %v581
    %v583 = vpop.f32.mrf.mxu0
    %v584 = vpop.f32.mrf.mxu0
    %v585 = vadd.f32 %v544, %v584
    %v586 = vpop.f32.mrf.mxu0
    %587 = vdwg.mxu0
    %588 = vmatprep.subr.bf16.mxu0 0
    %589 = vmatpush1.bf16.msra.mxu0 0
    %590 = vmatprep.subr.bf16.mxu0 0
    %591 = vmatpush1.bf16.msra.mxu0 0
    %592 = vmatprep.subr.bf16.mxu0 0
    %593 = vmatpush1.bf16.msra.mxu0 0
    %594 = vmatprep.subr.bf16.mxu0 0
    %595 = vmatpush1.bf16.msra.mxu0 0
    %596 = vmatprep.subr.bf16.mxu0 0
    %597 = vmatpush1.bf16.msra.mxu0 0
    %598 = vmatprep.subr.bf16.mxu0 0
    %599 = vmatpush1.bf16.msra.mxu0 0
    %600 = vmatprep.subr.bf16.mxu0 0
    %601 = vmatpush1.bf16.msra.mxu0 0
    %602 = vmatprep.subr.bf16.mxu0 0
    %603 = vmatpush1.bf16.msra.mxu0 %v411
    %604 = vmatprep.subr.bf16.mxu0 0
    %605 = vmatpush2.bf16.msra.mxu0 0
    %606 = vmatprep.subr.bf16.mxu0 0
    %607 = vmatpush2.bf16.msra.mxu0 0
    %608 = vmatprep.subr.bf16.mxu0 0
    %609 = vmatpush2.bf16.msra.mxu0 0
    %610 = vmatprep.subr.bf16.mxu0 0
    %611 = vmatpush2.bf16.msra.mxu0 0
    %612 = vmatprep.subr.bf16.mxu0 0
    %613 = vmatpush2.bf16.msra.mxu0 0
    %614 = vmatprep.subr.bf16.mxu0 0
    %615 = vmatpush2.bf16.msra.mxu0 0
    %616 = vmatprep.subr.bf16.mxu0 0
    %617 = vmatpush2.bf16.msra.mxu0 0
    %618 = vmatprep.subr.bf16.mxu0 0
    %619 = vmatpush2.bf16.msra.mxu0 0
    %620 = vmatprep.mubr.bf16.mxu0 0
    %621 = vmatmul.mubr.bf16.gmra.mxu0 %v463
    %v622 = vpop.f32.mrf.mxu0
    %v623 = vadd.f32 %v582, %v622
    %v624 = vpop.f32.mrf.mxu0
    %v625 = vpop.f32.mrf.mxu0
    %v626 = vadd.f32 %v585, %v625
    %v627 = vpop.f32.mrf.mxu0
    %628 = vdwg.mxu0
    %v629 = vmax.f32 %v623, 0.0
    %v630 = vmax.f32 %v626, 0.0
    %v631 = vpack.c.bf16 %v630, %v629
    %v632 = vld [vmem:[%s3] sm:$0xf]
    %v633 = vld [vmem:[%s3 + $0x4] sm:$0xf]
    %v634 = vld [vmem:[%s3 + $0x8] sm:$0xf]
    %v635 = vld [vmem:[%s3 + $0xc] sm:$0xf]
    %v636 = vld [vmem:[%s3 + $0x10] sm:$0xf]
    %v637 = vld [vmem:[%s3 + $0x14] sm:$0xf]
    %v638 = vld [vmem:[%s3 + $0x18] sm:$0xf]
    %v639 = vld [vmem:[%s3 + $0x1c] sm:$0xf]
    %v640 = vld [vmem:[%s3 + $0x20] sm:$0xf]
    %v641 = vld [vmem:[%s3 + $0x24] sm:$0xf]
    %v642 = vld [vmem:[%s3 + $0x28] sm:$0xf]
    %v643 = vld [vmem:[%s3 + $0x2c] sm:$0xf]
    %v644 = vld [vmem:[%s3 + $0x30] sm:$0xf]
    %v645 = vld [vmem:[%s3 + $0x34] sm:$0xf]
    %v646 = vld [vmem:[%s3 + $0x38] sm:$0xf]
    %v647 = vld [vmem:[%s3 + $0x3c] sm:$0xf]
    %v648 = vld [vmem:[%s4] sm:$0x1]
    %v650 = vlaneseq
    %v651 = vshrl.u32 %v650, 7
    %v652 = vsub.s32 0, %v651
    %v653 = vrot.slane %v648, %v652
    %v671 = vunpack.c.l.b16 %v632
    %v672 = vunpack.c.l.b16 %v633
    %v673 = vunpack.c.l.b16 %v634
    %v674 = vunpack.c.l.b16 %v635
    %v675 = vunpack.c.l.b16 %v636
    %v676 = vunpack.c.l.b16 %v637
    %v677 = vunpack.c.l.b16 %v638
    %v678 = vunpack.c.l.b16 %v639
    %v679 = vunpack.c.l.b16 %v640
    %v680 = vunpack.c.l.b16 %v641
    %v681 = vunpack.c.l.b16 %v642
    %v682 = vunpack.c.l.b16 %v643
    %v683 = vunpack.c.l.b16 %v644
    %v684 = vunpack.c.l.b16 %v645
    %v685 = vunpack.c.l.b16 %v646
    %v686 = vunpack.c.l.b16 %v647
    %v687 = vpack.c.b16 %v672, %v671
    %v688 = vpack.c.b16 %v674, %v673
    %v689 = vpack.c.b16 %v676, %v675
    %v690 = vpack.c.b16 %v678, %v677
    %v691 = vpack.c.b16 %v680, %v679
    %v692 = vpack.c.b16 %v682, %v681
    %v693 = vpack.c.b16 %v684, %v683
    %v694 = vpack.c.b16 %v686, %v685
    %703 = vmatprep.subr.bf16.mxu0 0
    %704 = vmatpush1.bf16.msra.mxu0 %v694
    %705 = vmatprep.subr.bf16.mxu0 0
    %706 = vmatpush1.bf16.msra.mxu0 %v693
    %707 = vmatprep.subr.bf16.mxu0 0
    %708 = vmatpush1.bf16.msra.mxu0 %v692
    %709 = vmatprep.subr.bf16.mxu0 0
    %710 = vmatpush1.bf16.msra.mxu0 %v691
    %711 = vmatprep.subr.bf16.mxu0 0
    %712 = vmatpush1.bf16.msra.mxu0 %v690
    %713 = vmatprep.subr.bf16.mxu0 0
    %714 = vmatpush1.bf16.msra.mxu0 %v689
    %715 = vmatprep.subr.bf16.mxu0 0
    %716 = vmatpush1.bf16.msra.mxu0 %v688
    %717 = vmatprep.subr.bf16.mxu0 0
    %718 = vmatpush1.bf16.msra.mxu0 %v687
    %719 = vmatprep.subr.bf16.mxu0 0
    %720 = vmatpush2.bf16.msra.mxu0 0
    %721 = vmatprep.subr.bf16.mxu0 0
    %722 = vmatpush2.bf16.msra.mxu0 0
    %723 = vmatprep.subr.bf16.mxu0 0
    %724 = vmatpush2.bf16.msra.mxu0 0
    %725 = vmatprep.subr.bf16.mxu0 0
    %726 = vmatpush2.bf16.msra.mxu0 0
    %727 = vmatprep.subr.bf16.mxu0 0
    %728 = vmatpush2.bf16.msra.mxu0 0
    %729 = vmatprep.subr.bf16.mxu0 0
    %730 = vmatpush2.bf16.msra.mxu0 0
    %731 = vmatprep.subr.bf16.mxu0 0
    %732 = vmatpush2.bf16.msra.mxu0 0
    %733 = vmatprep.subr.bf16.mxu0 0
    %734 = vmatpush2.bf16.msra.mxu0 0
    %735 = vmatprep.mubr.bf16.mxu0 0
    %736 = vmatmul.mubr.bf16.gmra.mxu0 %v631
    %v737 = vpop.f32.mrf.mxu0
    %v738 = vadd.f32 %v653, %v737
    %v739 = vpop.f32.mrf.mxu0
    %v740 = vpop.f32.mrf.mxu0
    %v741 = vadd.f32 %v653, %v740
    %v742 = vpop.f32.mrf.mxu0
    %743 = vdwg.mxu0
    %v744 = vmax.f32 %v738, 0.0
    %v745 = vmax.f32 %v741, 0.0
    %v746 = vpack.c.bf16 %v745, %v744
    %v747 = vld [vmem:[%s5] sm:$0xf]
    %v748 = vld [vmem:[%s5 + $0x4] sm:$0xf]
    %v749 = vld [vmem:[%s5 + $0x8] sm:$0xf]
    %v750 = vld [vmem:[%s5 + $0xc] sm:$0xf]
    %v751 = vld [vmem:[%s5 + $0x10] sm:$0xf]
    %v752 = vld [vmem:[%s5 + $0x14] sm:$0xf]
    %v753 = vld [vmem:[%s5 + $0x18] sm:$0xf]
    %v754 = vld [vmem:[%s5 + $0x1c] sm:$0xf]
    %v755 = vld [vmem:[%s5 + $0x20] sm:$0xf]
    %v756 = vld [vmem:[%s5 + $0x24] sm:$0xf]
    %v757 = vld [vmem:[%s5 + $0x28] sm:$0xf]
    %v758 = vld [vmem:[%s5 + $0x2c] sm:$0xf]
    %v759 = vld [vmem:[%s5 + $0x30] sm:$0xf]
    %v760 = vld [vmem:[%s5 + $0x34] sm:$0xf]
    %v761 = vld [vmem:[%s5 + $0x38] sm:$0xf]
    %v762 = vld [vmem:[%s5 + $0x3c] sm:$0xf]
    %v763 = vld [vmem:[%s6] sm:$0x1]
    %v765 = vlaneseq
    %v766 = vshrl.u32 %v765, 7
    %v767 = vsub.s32 0, %v766
    %v768 = vrot.slane %v763, %v767
    %v786 = vunpack.c.l.b16 %v747
    %v787 = vunpack.c.l.b16 %v748
    %v788 = vunpack.c.l.b16 %v749
    %v789 = vunpack.c.l.b16 %v750
    %v790 = vunpack.c.l.b16 %v751
    %v791 = vunpack.c.l.b16 %v752
    %v792 = vunpack.c.l.b16 %v753
    %v793 = vunpack.c.l.b16 %v754
    %v794 = vunpack.c.l.b16 %v755
    %v795 = vunpack.c.l.b16 %v756
    %v796 = vunpack.c.l.b16 %v757
    %v797 = vunpack.c.l.b16 %v758
    %v798 = vunpack.c.l.b16 %v759
    %v799 = vunpack.c.l.b16 %v760
    %v800 = vunpack.c.l.b16 %v761
    %v801 = vunpack.c.l.b16 %v762
    %v802 = vpack.c.b16 %v787, %v786
    %v803 = vpack.c.b16 %v789, %v788
    %v804 = vpack.c.b16 %v791, %v790
    %v805 = vpack.c.b16 %v793, %v792
    %v806 = vpack.c.b16 %v795, %v794
    %v807 = vpack.c.b16 %v797, %v796
    %v808 = vpack.c.b16 %v799, %v798
    %v809 = vpack.c.b16 %v801, %v800
    %818 = vmatprep.subr.bf16.mxu0 0
    %819 = vmatpush1.bf16.msra.mxu0 %v809
    %820 = vmatprep.subr.bf16.mxu0 0
    %821 = vmatpush1.bf16.msra.mxu0 %v808
    %822 = vmatprep.subr.bf16.mxu0 0
    %823 = vmatpush1.bf16.msra.mxu0 %v807
    %824 = vmatprep.subr.bf16.mxu0 0
    %825 = vmatpush1.bf16.msra.mxu0 %v806
    %826 = vmatprep.subr.bf16.mxu0 0
    %827 = vmatpush1.bf16.msra.mxu0 %v805
    %828 = vmatprep.subr.bf16.mxu0 0
    %829 = vmatpush1.bf16.msra.mxu0 %v804
    %830 = vmatprep.subr.bf16.mxu0 0
    %831 = vmatpush1.bf16.msra.mxu0 %v803
    %832 = vmatprep.subr.bf16.mxu0 0
    %833 = vmatpush1.bf16.msra.mxu0 %v802
    %834 = vmatprep.subr.bf16.mxu0 0
    %835 = vmatpush2.bf16.msra.mxu0 0
    %836 = vmatprep.subr.bf16.mxu0 0
    %837 = vmatpush2.bf16.msra.mxu0 0
    %838 = vmatprep.subr.bf16.mxu0 0
    %839 = vmatpush2.bf16.msra.mxu0 0
    %840 = vmatprep.subr.bf16.mxu0 0
    %841 = vmatpush2.bf16.msra.mxu0 0
    %842 = vmatprep.subr.bf16.mxu0 0
    %843 = vmatpush2.bf16.msra.mxu0 0
    %844 = vmatprep.subr.bf16.mxu0 0
    %845 = vmatpush2.bf16.msra.mxu0 0
    %846 = vmatprep.subr.bf16.mxu0 0
    %847 = vmatpush2.bf16.msra.mxu0 0
    %848 = vmatprep.subr.bf16.mxu0 0
    %849 = vmatpush2.bf16.msra.mxu0 0
    %850 = vmatprep.mubr.bf16.mxu0 0
    %851 = vmatmul.mubr.bf16.gmra.mxu0 %v746
    %v852 = vpop.f32.mrf.mxu0
    %v853 = vadd.f32 %v768, %v852
    %v854 = vpop.f32.mrf.mxu0
    %v855 = vpop.f32.mrf.mxu0
    %v856 = vadd.f32 %v768, %v855
    %v857 = vpop.f32.mrf.mxu0
    %858 = vdwg.mxu0
    %v859 = vpack.c.bf16 %v856, %v853
    %v861 = vunpack.c.l.b16 %v859
    %v862 = vunpack.c.h.b16 %v859
    %v863 = vpack.c.b16 %v861, %v861
    %v864 = vpack.c.b16 %v862, %v862
    %867 = vst [vmem:[%s7] sm:$0xf] %v863
    %868 = vst [vmem:[%s7 + $0x4] sm:$0xf] %v864
    // Predicated region
    $region34: #{quantized_very_simple_net.1} parent=1 // pred_check
      _
    $region35: #{quantized_very_simple_net.1} parent=1 // pred_check_branch
      %870 = sbr.rel (0) target = $region37
    $region36: #{quantized_very_simple_net.1} parent=1 // pred_region
      _
    $region37: #{quantized_very_simple_net.1} parent=1 // pred_fallthru
      _
    // Predicated region
    $region38: #{quantized_very_simple_net.1} parent=1 // pred_check
      _
    $region39: #{quantized_very_simple_net.1} parent=1 // pred_check_branch
      %872 = sbr.rel (0) target = $region41
    $region40: #{quantized_very_simple_net.1} parent=1 // pred_region
      _
    $region41: #{quantized_very_simple_net.1} parent=1 // pred_fallthru
      _
    %873 = vsyncpa [#allocation3], 1

</llo_original>
